<compile_context>
chip_gen: v6e
topology: v6e:2x2x1
jax: 0.10.0
libtpu: 0.0.40
codegen_flags: <defaults>
</compile_context>

<pallas_src>
import jax
import jax.numpy as jnp
from jax.experimental import pallas as pl
from jax.experimental.pallas import tpu as pltpu

_LANES = 128                      # vreg lane width
_TWO_CORE_SPLIT_BYTES = 1 << 20   # split >=1 MiB single-block cases across 2 TCs (v7x)


def _round_up(n, m):
    return ((n + m - 1) // m) * m


def _sublane_multiple(dtype) -> int:
    """Min sublane multiple for the dtype's vreg packing (8 f32 / 16 bf16 / 32 i8)."""
    itemsize = jnp.dtype(dtype).itemsize
    return max(8, 32 // max(itemsize, 1))


def _block_config():
    """Generation-aware (block_bytes, vmem_limit_bytes)."""
    try:
        kind = jax.devices()[0].device_kind.lower()
    except Exception:
        kind = ""
    if ("v7" in kind) or ("7x" in kind):
        # 64 MiB physical VMEM/TC: ~6 MiB blocks -> 4x double-buffered ~24 MiB.
        return 6 * 1024 * 1024, 40 * 1024 * 1024
    if ("v5" in kind) or ("v6" in kind):
        # 128 MiB physical VMEM: 8 MiB blocks, raise scoped limit past defaults.
        return 8 * 1024 * 1024, 64 * 1024 * 1024
    # Unknown part (v2/v3/CPU emulation): stay conservative, keep default limit.
    return 2 * 1024 * 1024, None


_BLOCK_BYTES, _VMEM_LIMIT_BYTES = _block_config()


def _hardsigmoid_kernel(x_ref, o_ref):
    x = x_ref[...]
    # Keep bf16/f32 math in native dtype (bf16-native VPUs on v6e/v7x; Mosaic
    # widens internally on v5e); upcast anything else to f32.
    if x.dtype not in (jnp.dtype(jnp.float32), jnp.dtype(jnp.bfloat16)):
        x = x.astype(jnp.float32)
    y = jnp.minimum(jnp.maximum(x + 3.0, 0.0), 6.0) / 6.0   # relu6(x+3)/6
    o_ref[...] = y.astype(o_ref.dtype)


@jax.jit
def hardsigmoid_forward(x):
    """Elementwise Hardsigmoid on an arbitrarily-shaped array."""
    orig_shape = x.shape
    dtype = x.dtype
    total = x.size
    itemsize = jnp.dtype(dtype).itemsize
    sub = _sublane_multiple(dtype)
    lane_tile = sub * _LANES

    x_flat = x.reshape(-1)
    padded_total = _round_up(total, lane_tile)
    needs_pad = padded_total != total
    if needs_pad:
        # TODO(synk): ragged tails (total % (sub*128) != 0) take a pad+slice
        # fallback (two extra HBM passes); the aligned path below takes none.
        x_flat = jnp.pad(x_flat, (0, padded_total - total))

    rows = padded_total // _LANES                      # multiple of `sub`
    max_blk_rows = max(sub, _round_up(_BLOCK_BYTES // (_LANES * itemsize), sub))

    if rows > max_blk_rows:
        blk_rows = max_blk_rows                        # partial edge block is masked
    elif rows * _LANES * itemsize >= _TWO_CORE_SPLIT_BYTES and rows >= 2 * sub:
        blk_rows = _round_up(pl.cdiv(rows, 2), sub)    # give both v7x TCs work
    else:
        blk_rows = rows
    num_blocks = pl.cdiv(rows, blk_rows)

    compiler_kwargs = dict(dimension_semantics=("parallel",))
    if _VMEM_LIMIT_BYTES is not None:
        compiler_kwargs["vmem_limit_bytes"] = _VMEM_LIMIT_BYTES

    x2d = x_flat.reshape(rows, _LANES)
    out2d = pl.pallas_call(
        _hardsigmoid_kernel,
        out_shape=jax.ShapeDtypeStruct((rows, _LANES), dtype),
        grid_spec=pltpu.PrefetchScalarGridSpec(
            num_scalar_prefetch=0,
            grid=(num_blocks,),
            in_specs=[pl.BlockSpec((blk_rows, _LANES), lambda i: (i, 0))],
            out_specs=pl.BlockSpec((blk_rows, _LANES), lambda i: (i, 0)),
        ),
        compiler_params=pltpu.CompilerParams(**compiler_kwargs),
    )(x2d)

    out_flat = out2d.reshape(-1)
    if needs_pad:
        out_flat = out_flat[:total]
    return out_flat.reshape(orig_shape)


# ---------------------------------------------------------------------------
# Pure-JAX reference (matches PyTorch nn.Hardsigmoid: relu6(x + 3) / 6).
# ---------------------------------------------------------------------------
def hardsigmoid_reference(x):
    xf = x.astype(jnp.float32)
    return (jnp.minimum(jnp.maximum(xf + 3.0, 0.0), 6.0) / 6.0).astype(x.dtype)


if __name__ == "__main__":
    key = jax.random.PRNGKey(0)
    k1, k2 = jax.random.split(key)

    # Small NCHW activation tensor spanning the [-3, 3] knee region (aligned path).
    x = jax.random.normal(k1, (2, 4, 16, 16), jnp.float32) * 3.0
    out = jax.block_until_ready(hardsigmoid_forward(x))
    ref = hardsigmoid_reference(x)
    assert out.shape == x.shape, out.shape
    max_err = float(jnp.max(jnp.abs(out - ref)))
    assert bool(jnp.allclose(out, ref, atol=1e-6, rtol=1e-6)), f"max abs err = {max_err}"

    # Awkward (non-multiple-of-sub*128) shape to exercise the ragged fallback.
    y = jax.random.normal(k2, (3, 5, 7), jnp.float32) * 4.0
    out2 = jax.block_until_ready(hardsigmoid_forward(y))
    ref2 = hardsigmoid_reference(y)
    assert out2.shape == y.shape, out2.shape
    max_err2 = float(jnp.max(jnp.abs(out2 - ref2)))
    assert bool(jnp.allclose(out2, ref2, atol=1e-6, rtol=1e-6)), f"max abs err = {max_err2}"

    print("KERNEL_OK")
</pallas_src>

<mosaic_0001>
module attributes {stable_mosaic.version = 11 : i64} {
  func.func @_hardsigmoid_kernel(%arg0: i32, %arg1: memref<16x128xf32, #tpu.memory_space<vmem>>, %arg2: memref<16x128xf32, #tpu.memory_space<vmem>>) attributes {dimension_semantics = [#tpu.dimension_semantics<parallel>], iteration_bounds = array<i64: 1>, scalar_prefetch = 0 : i64, scratch_operands = 0 : i64, tpu.core_type = #tpu.core_type<tc>, window_params = [{transform_indices = @transform_0, window_bounds = array<i64: 16, 128>}, {transform_indices = @transform_1, window_bounds = array<i64: 16, 128>}]} {
    %c0 = arith.constant 0 : index
    %c0_0 = arith.constant 0 : index
    %0 = vector.load %arg1[%c0, %c0_0] : memref<16x128xf32, #tpu.memory_space<vmem>>, vector<16x128xf32>
    %cst = arith.constant 3.000000e+00 : f32
    %1 = vector.broadcast %cst : f32 to vector<16x128xf32>
    %2 = arith.addf %0, %1 : vector<16x128xf32>
    %cst_1 = arith.constant 0.000000e+00 : f32
    %3 = vector.broadcast %cst_1 : f32 to vector<16x128xf32>
    %4 = arith.maximumf %2, %3 : vector<16x128xf32>
    %cst_2 = arith.constant 6.000000e+00 : f32
    %5 = vector.broadcast %cst_2 : f32 to vector<16x128xf32>
    %6 = arith.minimumf %4, %5 : vector<16x128xf32>
    %cst_3 = arith.constant 6.000000e+00 : f32
    %7 = vector.broadcast %cst_3 : f32 to vector<16x128xf32>
    %8 = arith.divf %6, %7 : vector<16x128xf32>
    %c0_4 = arith.constant 0 : index
    %c0_5 = arith.constant 0 : index
    %9 = vector.load %arg2[%c0_4, %c0_5] : memref<16x128xf32, #tpu.memory_space<vmem>>, vector<16x128xf32>
    tpu.vector_store %arg2[%c0_4, %c0_5], %8 {strides = array<i32>} : memref<16x128xf32, #tpu.memory_space<vmem>>, vector<16x128xf32>,
    return
  }
  func.func @transform_0(%arg0: i32) -> (i32, i32) {
    %c0_i32 = arith.constant 0 : i32
    %c0_i32_0 = arith.constant 0 : i32
    return %arg0, %c0_i32 : i32, i32
  }
  func.func @transform_1(%arg0: i32) -> (i32, i32) {
    %c0_i32 = arith.constant 0 : i32
    %c0_i32_0 = arith.constant 0 : i32
    return %arg0, %c0_i32 : i32, i32
  }
}

</mosaic_0001>

<llo_original>
// kernel: hardsigmoid_forward.1
$region0: #{hardsigmoid_forward.1}
  #allocation0 [shape = 'u32[]', space=smem, size = 0x4, offset = 0x4, fixed_abs, tag = 'smem constant byte address 0x4 - core index']
  #allocation1 [shape = 'u32[144,128]{1,0:T(1,128)}', space=vmem, size = 0x12000, scoped, tag = 'internal scratch']
  %s0 = inlined_call_operand.vmem [shape: f32[16,128], index: 0, kind: input, shape index: {}]
  %s1 = inlined_call_operand.vmem [shape: f32[16,128], index: 1, kind: output, shape index: {}]
  %s2 = sld [smem:[#allocation0]]
  $region14: #{hardsigmoid_forward.1} parent=0
    _
  %s4 = ssub.s32 1, %s2
  %s5 = scalar_select 0, %s4, %s2
  // Predicated region
  $region2: #{hardsigmoid_forward.1} parent=0 // pred_check
    _
  $region3: #{hardsigmoid_forward.1} parent=0 // pred_check_branch
    %7 = sbr.rel (0) target = $region5
  $region4: #{hardsigmoid_forward.1} parent=0 // pred_region
    _
  $region5: #{hardsigmoid_forward.1} parent=0 // pred_fallthru
    _
  %v8 = vld [vmem:[%s0] sm:$0xff]
  %v9 = vld [vmem:[%s0 + $0x8] sm:$0xff]
  %v10 = vadd.f32 %v8, 3.0
  %v11 = vadd.f32 %v9, 3.0
  %v12 = vmax.f32 %v10, 0.0
  %v13 = vmax.f32 %v11, 0.0
  %v14 = vmin.f32 %v12, 6.0
  %v15 = vmin.f32 %v13, 6.0
  %v16 = vrcp.pop 6.0
  %v17 = vmul.f32 %v14, %v16
  %v18 = vmul.f32 %v15, %v16
  %19 = vst [vmem:[%s1] sm:$0xff] %v17
  %20 = vst [vmem:[%s1 + $0x8] sm:$0xff] %v18
  // Predicated region
  $region6: #{hardsigmoid_forward.1} parent=0 // pred_check
    _
  $region7: #{hardsigmoid_forward.1} parent=0 // pred_check_branch
    %22 = sbr.rel (0) target = $region9
  $region8: #{hardsigmoid_forward.1} parent=0 // pred_region
    _
  $region9: #{hardsigmoid_forward.1} parent=0 // pred_fallthru
    _
  // Predicated region
  $region10: #{hardsigmoid_forward.1} parent=0 // pred_check
    _
  $region11: #{hardsigmoid_forward.1} parent=0 // pred_check_branch
    %24 = sbr.rel (0) target = $region13
  $region12: #{hardsigmoid_forward.1} parent=0 // pred_region
    _
  $region13: #{hardsigmoid_forward.1} parent=0 // pred_fallthru
    _

</llo_original>
